<compile_context>
chip_gen: v5e
topology: v5e:2x2
jax: 0.10.0
libtpu: 0.0.40
codegen_flags: <defaults>
</compile_context>

<pallas_src>
import functools

import jax
import jax.numpy as jnp
from jax.experimental import pallas as pl
from jax.experimental.pallas import tpu as pltpu


def lstm_kernel(x_ref, wx_ref, wh_ref, bias_ref, out_ref, xw_scratch):
    """Whole LSTM forward in one kernel invocation (no grid).

    x_ref     : (B, T, I)   input sequence, batch-major (as the module sees it)
    wx_ref    : (I, 4H)     input -> gate weights
    wh_ref    : (H, 4H)     recurrent weights
    bias_ref  : (1, 4H)     gate bias
    out_ref   : (B, O)      final h_state[:, -O:] (per the module's swap, the
                            last c_prime, sliced)
    xw_scratch: (T, B, 4H)  VMEM scratch for the hoisted input projection,
                            time-major so the recurrence indexes its lead dim
    """
    B, T, _ = x_ref.shape
    H = wh_ref.shape[0]
    O = out_ref.shape[1]

    # ---- Phase 1: fused input projection (off the serial chain) -----------
    wx = wx_ref[...]
    bias = bias_ref[...]
    for t in range(T):  # static T, static slices -> simple, robust lowering
        xw_scratch[t] = (
            jnp.dot(x_ref[:, t, :], wx, preferred_element_type=jnp.float32)
            + bias)

    # ---- Phase 2: serial recurrence ----------------------------------------
    wh = wh_ref[...]  # loaded into vregs once, reused every step

    def step(t, carry):
        # carry = (h_state, c_state) exactly as named in the PyTorch module.
        h_state, c_state = carry

        # store = Linear(cat(x_t, h_state)); the x part + bias is precomputed.
        store = xw_scratch[t] + jnp.dot(
            h_state, wh, preferred_element_type=jnp.float32)      # (B, 4H)

        # Two full-vreg EUP passes over the packed gates, then static lane
        # slices (gate order: i, f, g, o).
        sig = jax.nn.sigmoid(store)
        th = jnp.tanh(store)
        i_g = sig[:, :H]
        f_g = sig[:, H:2 * H]
        g_g = th[:, 2 * H:3 * H]
        o_g = sig[:, 3 * H:]

        c_prime = f_g * c_state + i_g * g_g
        h_prime = o_g * jnp.tanh(c_prime)

        # Reproduce the module's (c_prime, h_prime) -> (h_state, c_state) swap.
        return (c_prime, h_prime)

    init = (jnp.zeros((B, H), jnp.float32),
            jnp.zeros((B, H), jnp.float32))
    # Bounded unroll: full unroll at small T, capped so long sequences do not
    # blow up instruction memory / compile time.
    h_final, _ = jax.lax.fori_loop(0, T, step, init, unroll=min(T, 8))

    # ---- Phase 3: fused output slice (module: h_state[:, -output_size:]) ---
    # O=8 lanes -> one tiny masked store; negligible at this size.
    out_ref[...] = h_final[:, H - O:]


@functools.partial(jax.jit, static_argnames=("hidden_size", "output_size"))
def lstm_forward(x, wx, wh, bias, *, hidden_size, output_size):
    """x: (B, T, I) float32  ->  (B, output_size) float32."""
    B, T, _ = x.shape
    return pl.pallas_call(
        lstm_kernel,
        out_shape=jax.ShapeDtypeStruct((B, output_size), jnp.float32),
        in_specs=[
            pl.BlockSpec(memory_space=pltpu.MemorySpace.VMEM),  # x (whole)
            pl.BlockSpec(memory_space=pltpu.MemorySpace.VMEM),  # wx
            pl.BlockSpec(memory_space=pltpu.MemorySpace.VMEM),  # wh
            pl.BlockSpec(memory_space=pltpu.MemorySpace.VMEM),  # bias
        ],
        out_specs=pl.BlockSpec(memory_space=pltpu.MemorySpace.VMEM),
        scratch_shapes=[pltpu.VMEM((T, B, 4 * hidden_size), jnp.float32)],
    )(x, wx, wh, bias)


def lstm_reference(x, wx, wh, bias, *, hidden_size, output_size):
    """Pure-JAX reference reproducing the PyTorch module (incl. the swap)."""
    B, T, _ = x.shape
    h_state = jnp.zeros((B, hidden_size), jnp.float32)
    c_state = jnp.zeros((B, hidden_size), jnp.float32)
    for t in range(T):
        store = x[:, t] @ wx + h_state @ wh + bias  # (B, 4H)
        i_g = jax.nn.sigmoid(store[:, :hidden_size])
        f_g = jax.nn.sigmoid(store[:, hidden_size:2 * hidden_size])
        g_g = jnp.tanh(store[:, 2 * hidden_size:3 * hidden_size])
        o_g = jax.nn.sigmoid(store[:, 3 * hidden_size:])
        c_prime = f_g * c_state + i_g * g_g
        h_prime = o_g * jnp.tanh(c_prime)
        h_state, c_state = c_prime, h_prime   # the swap, as in the module
    return h_state[:, -output_size:]


if __name__ == "__main__":
    # Small shapes consistent with the module's forward signature.
    batch, seq_len = 8, 8
    input_size, hidden_size, output_size = 16, 32, 8

    key = jax.random.PRNGKey(0)
    kx, kw, kb = jax.random.split(key, 3)

    # Deterministic synthetic parameters, matching torch.nn.Linear shapes:
    #   W.weight: (4H, I+H),  W.bias: (4H,)
    bound = 1.0 / jnp.sqrt(jnp.float32(input_size + hidden_size))
    W_full = jax.random.uniform(
        kw, (4 * hidden_size, input_size + hidden_size),
        minval=-bound, maxval=bound, dtype=jnp.float32)
    b_full = jax.random.uniform(
        kb, (4 * hidden_size,), minval=-bound, maxval=bound,
        dtype=jnp.float32)

    # Pre-transpose for the kernel:  cat(x, h) @ W.T = x @ Wx + h @ Wh
    wx = jnp.transpose(W_full[:, :input_size])    # (I, 4H)
    wh = jnp.transpose(W_full[:, input_size:])    # (H, 4H)
    bias = b_full.reshape(1, 4 * hidden_size)     # (1, 4H)

    x = jax.random.normal(kx, (batch, seq_len, input_size), dtype=jnp.float32)

    out = lstm_forward(x, wx, wh, bias,
                       hidden_size=hidden_size, output_size=output_size)
    out = jax.block_until_ready(out)

    ref = lstm_reference(x, wx, wh, bias,
                         hidden_size=hidden_size, output_size=output_size)
    assert out.shape == (batch, output_size)
    assert jnp.allclose(out, ref, rtol=1e-5, atol=1e-5), "mismatch vs reference"

    print("KERNEL_OK")
</pallas_src>

<mosaic_0001>
module attributes {stable_mosaic.version = 11 : i64} {
  func.func @lstm_kernel(%arg0: memref<8x8x16xf32, #tpu.memory_space<vmem>>, %arg1: memref<16x128xf32, #tpu.memory_space<vmem>>, %arg2: memref<32x128xf32, #tpu.memory_space<vmem>>, %arg3: memref<1x128xf32, #tpu.memory_space<vmem>>, %arg4: memref<8x8xf32, #tpu.memory_space<vmem>>, %arg5: memref<8x8x128xf32, #tpu.memory_space<vmem>>) attributes {dimension_semantics = [], scalar_prefetch = 0 : i64, scratch_operands = 1 : i64, tpu.core_type = #tpu.core_type<tc>} {
    %c0 = arith.constant 0 : index
    %c0_0 = arith.constant 0 : index
    %0 = vector.load %arg1[%c0, %c0_0] : memref<16x128xf32, #tpu.memory_space<vmem>>, vector<16x128xf32>
    %c0_1 = arith.constant 0 : index
    %c0_2 = arith.constant 0 : index
    %1 = vector.load %arg3[%c0_1, %c0_2] : memref<1x128xf32, #tpu.memory_space<vmem>>, vector<1x128xf32>
    %c0_3 = arith.constant 0 : index
    %c0_4 = arith.constant 0 : index
    %c0_5 = arith.constant 0 : index
    %2 = vector.load %arg0[%c0_3, %c0_4, %c0_5] : memref<8x8x16xf32, #tpu.memory_space<vmem>>, vector<8x1x16xf32>
    %3 = vector.shape_cast %2 : vector<8x1x16xf32> to vector<8x16xf32>
    %cst = arith.constant dense<0.000000e+00> : vector<8x128xf32>
    %4 = tpu.matmul %3, %0, %cst {dimension_numbers = #tpu.dot_dimension_numbers<[1], [0], [0], [1], [0, 0, 1, 1], [], []>} : vector<8x16xf32>, vector<16x128xf32>, vector<8x128xf32> -> vector<8x128xf32>
    %5 = vector.broadcast %1 : vector<1x128xf32> to vector<8x128xf32>
    %6 = arith.addf %4, %5 : vector<8x128xf32>
    %c0_6 = arith.constant 0 : index
    %c0_7 = arith.constant 0 : index
    %c0_8 = arith.constant 0 : index
    %7 = vector.load %arg5[%c0_6, %c0_7, %c0_8] : memref<8x8x128xf32, #tpu.memory_space<vmem>>, vector<1x8x128xf32>
    %8 = vector.shape_cast %7 : vector<1x8x128xf32> to vector<8x128xf32>
    %9 = vector.shape_cast %6 : vector<8x128xf32> to vector<1x8x128xf32>
    tpu.vector_store %arg5[%c0_6, %c0_7, %c0_8], %9 {strides = array<i32>} : memref<8x8x128xf32, #tpu.memory_space<vmem>>, vector<1x8x128xf32>,
    %c0_9 = arith.constant 0 : index
    %c1 = arith.constant 1 : index
    %c0_10 = arith.constant 0 : index
    %10 = vector.load %arg0[%c0_9, %c1, %c0_10] : memref<8x8x16xf32, #tpu.memory_space<vmem>>, vector<8x1x16xf32>
    %11 = vector.shape_cast %10 : vector<8x1x16xf32> to vector<8x16xf32>
    %cst_11 = arith.constant dense<0.000000e+00> : vector<8x128xf32>
    %12 = tpu.matmul %11, %0, %cst_11 {dimension_numbers = #tpu.dot_dimension_numbers<[1], [0], [0], [1], [0, 0, 1, 1], [], []>} : vector<8x16xf32>, vector<16x128xf32>, vector<8x128xf32> -> vector<8x128xf32>
    %13 = vector.broadcast %1 : vector<1x128xf32> to vector<8x128xf32>
    %14 = arith.addf %12, %13 : vector<8x128xf32>
    %c1_12 = arith.constant 1 : index
    %c0_13 = arith.constant 0 : index
    %c0_14 = arith.constant 0 : index
    %15 = vector.load %arg5[%c1_12, %c0_13, %c0_14] : memref<8x8x128xf32, #tpu.memory_space<vmem>>, vector<1x8x128xf32>
    %16 = vector.shape_cast %15 : vector<1x8x128xf32> to vector<8x128xf32>
    %17 = vector.shape_cast %14 : vector<8x128xf32> to vector<1x8x128xf32>
    tpu.vector_store %arg5[%c1_12, %c0_13, %c0_14], %17 {strides = array<i32>} : memref<8x8x128xf32, #tpu.memory_space<vmem>>, vector<1x8x128xf32>,
    %c0_15 = arith.constant 0 : index
    %c2 = arith.constant 2 : index
    %c0_16 = arith.constant 0 : index
    %18 = vector.load %arg0[%c0_15, %c2, %c0_16] : memref<8x8x16xf32, #tpu.memory_space<vmem>>, vector<8x1x16xf32>
    %19 = vector.shape_cast %18 : vector<8x1x16xf32> to vector<8x16xf32>
    %cst_17 = arith.constant dense<0.000000e+00> : vector<8x128xf32>
    %20 = tpu.matmul %19, %0, %cst_17 {dimension_numbers = #tpu.dot_dimension_numbers<[1], [0], [0], [1], [0, 0, 1, 1], [], []>} : vector<8x16xf32>, vector<16x128xf32>, vector<8x128xf32> -> vector<8x128xf32>
    %21 = vector.broadcast %1 : vector<1x128xf32> to vector<8x128xf32>
    %22 = arith.addf %20, %21 : vector<8x128xf32>
    %c2_18 = arith.constant 2 : index
    %c0_19 = arith.constant 0 : index
    %c0_20 = arith.constant 0 : index
    %23 = vector.load %arg5[%c2_18, %c0_19, %c0_20] : memref<8x8x128xf32, #tpu.memory_space<vmem>>, vector<1x8x128xf32>
    %24 = vector.shape_cast %23 : vector<1x8x128xf32> to vector<8x128xf32>
    %25 = vector.shape_cast %22 : vector<8x128xf32> to vector<1x8x128xf32>
    tpu.vector_store %arg5[%c2_18, %c0_19, %c0_20], %25 {strides = array<i32>} : memref<8x8x128xf32, #tpu.memory_space<vmem>>, vector<1x8x128xf32>,
    %c0_21 = arith.constant 0 : index
    %c3 = arith.constant 3 : index
    %c0_22 = arith.constant 0 : index
    %26 = vector.load %arg0[%c0_21, %c3, %c0_22] : memref<8x8x16xf32, #tpu.memory_space<vmem>>, vector<8x1x16xf32>
    %27 = vector.shape_cast %26 : vector<8x1x16xf32> to vector<8x16xf32>
    %cst_23 = arith.constant dense<0.000000e+00> : vector<8x128xf32>
    %28 = tpu.matmul %27, %0, %cst_23 {dimension_numbers = #tpu.dot_dimension_numbers<[1], [0], [0], [1], [0, 0, 1, 1], [], []>} : vector<8x16xf32>, vector<16x128xf32>, vector<8x128xf32> -> vector<8x128xf32>
    %29 = vector.broadcast %1 : vector<1x128xf32> to vector<8x128xf32>
    %30 = arith.addf %28, %29 : vector<8x128xf32>
    %c3_24 = arith.constant 3 : index
    %c0_25 = arith.constant 0 : index
    %c0_26 = arith.constant 0 : index
    %31 = vector.load %arg5[%c3_24, %c0_25, %c0_26] : memref<8x8x128xf32, #tpu.memory_space<vmem>>, vector<1x8x128xf32>
    %32 = vector.shape_cast %31 : vector<1x8x128xf32> to vector<8x128xf32>
    %33 = vector.shape_cast %30 : vector<8x128xf32> to vector<1x8x128xf32>
    tpu.vector_store %arg5[%c3_24, %c0_25, %c0_26], %33 {strides = array<i32>} : memref<8x8x128xf32, #tpu.memory_space<vmem>>, vector<1x8x128xf32>,
    %c0_27 = arith.constant 0 : index
    %c4 = arith.constant 4 : index
    %c0_28 = arith.constant 0 : index
    %34 = vector.load %arg0[%c0_27, %c4, %c0_28] : memref<8x8x16xf32, #tpu.memory_space<vmem>>, vector<8x1x16xf32>
    %35 = vector.shape_cast %34 : vector<8x1x16xf32> to vector<8x16xf32>
    %cst_29 = arith.constant dense<0.000000e+00> : vector<8x128xf32>
    %36 = tpu.matmul %35, %0, %cst_29 {dimension_numbers = #tpu.dot_dimension_numbers<[1], [0], [0], [1], [0, 0, 1, 1], [], []>} : vector<8x16xf32>, vector<16x128xf32>, vector<8x128xf32> -> vector<8x128xf32>
    %37 = vector.broadcast %1 : vector<1x128xf32> to vector<8x128xf32>
    %38 = arith.addf %36, %37 : vector<8x128xf32>
    %c4_30 = arith.constant 4 : index
    %c0_31 = arith.constant 0 : index
    %c0_32 = arith.constant 0 : index
    %39 = vector.load %arg5[%c4_30, %c0_31, %c0_32] : memref<8x8x128xf32, #tpu.memory_space<vmem>>, vector<1x8x128xf32>
    %40 = vector.shape_cast %39 : vector<1x8x128xf32> to vector<8x128xf32>
    %41 = vector.shape_cast %38 : vector<8x128xf32> to vector<1x8x128xf32>
    tpu.vector_store %arg5[%c4_30, %c0_31, %c0_32], %41 {strides = array<i32>} : memref<8x8x128xf32, #tpu.memory_space<vmem>>, vector<1x8x128xf32>,
    %c0_33 = arith.constant 0 : index
    %c5 = arith.constant 5 : index
    %c0_34 = arith.constant 0 : index
    %42 = vector.load %arg0[%c0_33, %c5, %c0_34] : memref<8x8x16xf32, #tpu.memory_space<vmem>>, vector<8x1x16xf32>
    %43 = vector.shape_cast %42 : vector<8x1x16xf32> to vector<8x16xf32>
    %cst_35 = arith.constant dense<0.000000e+00> : vector<8x128xf32>
    %44 = tpu.matmul %43, %0, %cst_35 {dimension_numbers = #tpu.dot_dimension_numbers<[1], [0], [0], [1], [0, 0, 1, 1], [], []>} : vector<8x16xf32>, vector<16x128xf32>, vector<8x128xf32> -> vector<8x128xf32>
    %45 = vector.broadcast %1 : vector<1x128xf32> to vector<8x128xf32>
    %46 = arith.addf %44, %45 : vector<8x128xf32>
    %c5_36 = arith.constant 5 : index
    %c0_37 = arith.constant 0 : index
    %c0_38 = arith.constant 0 : index
    %47 = vector.load %arg5[%c5_36, %c0_37, %c0_38] : memref<8x8x128xf32, #tpu.memory_space<vmem>>, vector<1x8x128xf32>
    %48 = vector.shape_cast %47 : vector<1x8x128xf32> to vector<8x128xf32>
    %49 = vector.shape_cast %46 : vector<8x128xf32> to vector<1x8x128xf32>
    tpu.vector_store %arg5[%c5_36, %c0_37, %c0_38], %49 {strides = array<i32>} : memref<8x8x128xf32, #tpu.memory_space<vmem>>, vector<1x8x128xf32>,
    %c0_39 = arith.constant 0 : index
    %c6 = arith.constant 6 : index
    %c0_40 = arith.constant 0 : index
    %50 = vector.load %arg0[%c0_39, %c6, %c0_40] : memref<8x8x16xf32, #tpu.memory_space<vmem>>, vector<8x1x16xf32>
    %51 = vector.shape_cast %50 : vector<8x1x16xf32> to vector<8x16xf32>
    %cst_41 = arith.constant dense<0.000000e+00> : vector<8x128xf32>
    %52 = tpu.matmul %51, %0, %cst_41 {dimension_numbers = #tpu.dot_dimension_numbers<[1], [0], [0], [1], [0, 0, 1, 1], [], []>} : vector<8x16xf32>, vector<16x128xf32>, vector<8x128xf32> -> vector<8x128xf32>
    %53 = vector.broadcast %1 : vector<1x128xf32> to vector<8x128xf32>
    %54 = arith.addf %52, %53 : vector<8x128xf32>
    %c6_42 = arith.constant 6 : index
    %c0_43 = arith.constant 0 : index
    %c0_44 = arith.constant 0 : index
    %55 = vector.load %arg5[%c6_42, %c0_43, %c0_44] : memref<8x8x128xf32, #tpu.memory_space<vmem>>, vector<1x8x128xf32>
    %56 = vector.shape_cast %55 : vector<1x8x128xf32> to vector<8x128xf32>
    %57 = vector.shape_cast %54 : vector<8x128xf32> to vector<1x8x128xf32>
    tpu.vector_store %arg5[%c6_42, %c0_43, %c0_44], %57 {strides = array<i32>} : memref<8x8x128xf32, #tpu.memory_space<vmem>>, vector<1x8x128xf32>,
    %c0_45 = arith.constant 0 : index
    %c7 = arith.constant 7 : index
    %c0_46 = arith.constant 0 : index
    %58 = vector.load %arg0[%c0_45, %c7, %c0_46] : memref<8x8x16xf32, #tpu.memory_space<vmem>>, vector<8x1x16xf32>
    %59 = vector.shape_cast %58 : vector<8x1x16xf32> to vector<8x16xf32>
    %cst_47 = arith.constant dense<0.000000e+00> : vector<8x128xf32>
    %60 = tpu.matmul %59, %0, %cst_47 {dimension_numbers = #tpu.dot_dimension_numbers<[1], [0], [0], [1], [0, 0, 1, 1], [], []>} : vector<8x16xf32>, vector<16x128xf32>, vector<8x128xf32> -> vector<8x128xf32>
    %61 = vector.broadcast %1 : vector<1x128xf32> to vector<8x128xf32>
    %62 = arith.addf %60, %61 : vector<8x128xf32>
    %c7_48 = arith.constant 7 : index
    %c0_49 = arith.constant 0 : index
    %c0_50 = arith.constant 0 : index
    %63 = vector.load %arg5[%c7_48, %c0_49, %c0_50] : memref<8x8x128xf32, #tpu.memory_space<vmem>>, vector<1x8x128xf32>
    %64 = vector.shape_cast %63 : vector<1x8x128xf32> to vector<8x128xf32>
    %65 = vector.shape_cast %62 : vector<8x128xf32> to vector<1x8x128xf32>
    tpu.vector_store %arg5[%c7_48, %c0_49, %c0_50], %65 {strides = array<i32>} : memref<8x8x128xf32, #tpu.memory_space<vmem>>, vector<1x8x128xf32>,
    %c0_51 = arith.constant 0 : index
    %c0_52 = arith.constant 0 : index
    %66 = vector.load %arg2[%c0_51, %c0_52] : memref<32x128xf32, #tpu.memory_space<vmem>>, vector<32x128xf32>
    %cst_53 = arith.constant 0.000000e+00 : f32
    %67 = vector.broadcast %cst_53 : f32 to vector<8x32xf32>
    %cst_54 = arith.constant 0.000000e+00 : f32
    %68 = vector.broadcast %cst_54 : f32 to vector<8x32xf32>
    %c0_i32 = arith.constant 0 : i32
    %69 = arith.index_cast %c0_i32 : i32 to index
    %c0_55 = arith.constant 0 : index
    %c0_56 = arith.constant 0 : index
    %70 = vector.load %arg5[%69, %c0_55, %c0_56] : memref<8x8x128xf32, #tpu.memory_space<vmem>>, vector<1x8x128xf32>
    %71 = vector.shape_cast %70 : vector<1x8x128xf32> to vector<8x128xf32>
    %cst_57 = arith.constant dense<0.000000e+00> : vector<8x128xf32>
    %72 = tpu.matmul %67, %66, %cst_57 {dimension_numbers = #tpu.dot_dimension_numbers<[1], [0], [0], [1], [0, 0, 1, 1], [], []>} : vector<8x32xf32>, vector<32x128xf32>, vector<8x128xf32> -> vector<8x128xf32>
    %73 = arith.addf %71, %72 : vector<8x128xf32>
    %74 = arith.negf %73 : vector<8x128xf32>
    %75 = math.exp %74 : vector<8x128xf32>
    %cst_58 = arith.constant 1.000000e+00 : f32
    %76 = vector.broadcast %cst_58 : f32 to vector<8x128xf32>
    %77 = arith.addf %76, %75 : vector<8x128xf32>
    %78 = arith.divf %76, %77 : vector<8x128xf32>
    %79 = math.tanh %73 : vector<8x128xf32>
    %80 = vector.extract_strided_slice %78 {offsets = [0, 0], sizes = [8, 32], strides = [1, 1]} : vector<8x128xf32> to vector<8x32xf32>
    %81 = vector.extract_strided_slice %78 {offsets = [0, 32], sizes = [8, 32], strides = [1, 1]} : vector<8x128xf32> to vector<8x32xf32>
    %82 = vector.extract_strided_slice %79 {offsets = [0, 64], sizes = [8, 32], strides = [1, 1]} : vector<8x128xf32> to vector<8x32xf32>
    %83 = vector.extract_strided_slice %78 {offsets = [0, 96], sizes = [8, 32], strides = [1, 1]} : vector<8x128xf32> to vector<8x32xf32>
    %84 = arith.mulf %81, %68 : vector<8x32xf32>
    %85 = arith.mulf %80, %82 : vector<8x32xf32>
    %86 = arith.addf %84, %85 : vector<8x32xf32>
    %87 = math.tanh %86 : vector<8x32xf32>
    %88 = arith.mulf %83, %87 : vector<8x32xf32>
    %c1_i32 = arith.constant 1 : i32
    %89 = arith.index_cast %c1_i32 : i32 to index
    %c0_59 = arith.constant 0 : index
    %c0_60 = arith.constant 0 : index
    %90 = vector.load %arg5[%89, %c0_59, %c0_60] : memref<8x8x128xf32, #tpu.memory_space<vmem>>, vector<1x8x128xf32>
    %91 = vector.shape_cast %90 : vector<1x8x128xf32> to vector<8x128xf32>
    %cst_61 = arith.constant dense<0.000000e+00> : vector<8x128xf32>
    %92 = tpu.matmul %86, %66, %cst_61 {dimension_numbers = #tpu.dot_dimension_numbers<[1], [0], [0], [1], [0, 0, 1, 1], [], []>} : vector<8x32xf32>, vector<32x128xf32>, vector<8x128xf32> -> vector<8x128xf32>
    %93 = arith.addf %91, %92 : vector<8x128xf32>
    %94 = arith.negf %93 : vector<8x128xf32>
    %95 = math.exp %94 : vector<8x128xf32>
    %cst_62 = arith.constant 1.000000e+00 : f32
    %96 = vector.broadcast %cst_62 : f32 to vector<8x128xf32>
    %97 = arith.addf %96, %95 : vector<8x128xf32>
    %98 = arith.divf %96, %97 : vector<8x128xf32>
    %99 = math.tanh %93 : vector<8x128xf32>
    %100 = vector.extract_strided_slice %98 {offsets = [0, 0], sizes = [8, 32], strides = [1, 1]} : vector<8x128xf32> to vector<8x32xf32>
    %101 = vector.extract_strided_slice %98 {offsets = [0, 32], sizes = [8, 32], strides = [1, 1]} : vector<8x128xf32> to vector<8x32xf32>
    %102 = vector.extract_strided_slice %99 {offsets = [0, 64], sizes = [8, 32], strides = [1, 1]} : vector<8x128xf32> to vector<8x32xf32>
    %103 = vector.extract_strided_slice %98 {offsets = [0, 96], sizes = [8, 32], strides = [1, 1]} : vector<8x128xf32> to vector<8x32xf32>
    %104 = arith.mulf %101, %88 : vector<8x32xf32>
    %105 = arith.mulf %100, %102 : vector<8x32xf32>
    %106 = arith.addf %104, %105 : vector<8x32xf32>
    %107 = math.tanh %106 : vector<8x32xf32>
    %108 = arith.mulf %103, %107 : vector<8x32xf32>
    %c2_i32 = arith.constant 2 : i32
    %109 = arith.index_cast %c2_i32 : i32 to index
    %c0_63 = arith.constant 0 : index
    %c0_64 = arith.constant 0 : index
    %110 = vector.load %arg5[%109, %c0_63, %c0_64] : memref<8x8x128xf32, #tpu.memory_space<vmem>>, vector<1x8x128xf32>
    %111 = vector.shape_cast %110 : vector<1x8x128xf32> to vector<8x128xf32>
    %cst_65 = arith.constant dense<0.000000e+00> : vector<8x128xf32>
    %112 = tpu.matmul %106, %66, %cst_65 {dimension_numbers = #tpu.dot_dimension_numbers<[1], [0], [0], [1], [0, 0, 1, 1], [], []>} : vector<8x32xf32>, vector<32x128xf32>, vector<8x128xf32> -> vector<8x128xf32>
    %113 = arith.addf %111, %112 : vector<8x128xf32>
    %114 = arith.negf %113 : vector<8x128xf32>
    %115 = math.exp %114 : vector<8x128xf32>
    %cst_66 = arith.constant 1.000000e+00 : f32
    %116 = vector.broadcast %cst_66 : f32 to vector<8x128xf32>
    %117 = arith.addf %116, %115 : vector<8x128xf32>
    %118 = arith.divf %116, %117 : vector<8x128xf32>
    %119 = math.tanh %113 : vector<8x128xf32>
    %120 = vector.extract_strided_slice %118 {offsets = [0, 0], sizes = [8, 32], strides = [1, 1]} : vector<8x128xf32> to vector<8x32xf32>
    %121 = vector.extract_strided_slice %118 {offsets = [0, 32], sizes = [8, 32], strides = [1, 1]} : vector<8x128xf32> to vector<8x32xf32>
    %122 = vector.extract_strided_slice %119 {offsets = [0, 64], sizes = [8, 32], strides = [1, 1]} : vector<8x128xf32> to vector<8x32xf32>
    %123 = vector.extract_strided_slice %118 {offsets = [0, 96], sizes = [8, 32], strides = [1, 1]} : vector<8x128xf32> to vector<8x32xf32>
    %124 = arith.mulf %121, %108 : vector<8x32xf32>
    %125 = arith.mulf %120, %122 : vector<8x32xf32>
    %126 = arith.addf %124, %125 : vector<8x32xf32>
    %127 = math.tanh %126 : vector<8x32xf32>
    %128 = arith.mulf %123, %127 : vector<8x32xf32>
    %c3_i32 = arith.constant 3 : i32
    %129 = arith.index_cast %c3_i32 : i32 to index
    %c0_67 = arith.constant 0 : index
    %c0_68 = arith.constant 0 : index
    %130 = vector.load %arg5[%129, %c0_67, %c0_68] : memref<8x8x128xf32, #tpu.memory_space<vmem>>, vector<1x8x128xf32>
    %131 = vector.shape_cast %130 : vector<1x8x128xf32> to vector<8x128xf32>
    %cst_69 = arith.constant dense<0.000000e+00> : vector<8x128xf32>
    %132 = tpu.matmul %126, %66, %cst_69 {dimension_numbers = #tpu.dot_dimension_numbers<[1], [0], [0], [1], [0, 0, 1, 1], [], []>} : vector<8x32xf32>, vector<32x128xf32>, vector<8x128xf32> -> vector<8x128xf32>
    %133 = arith.addf %131, %132 : vector<8x128xf32>
    %134 = arith.negf %133 : vector<8x128xf32>
    %135 = math.exp %134 : vector<8x128xf32>
    %cst_70 = arith.constant 1.000000e+00 : f32
    %136 = vector.broadcast %cst_70 : f32 to vector<8x128xf32>
    %137 = arith.addf %136, %135 : vector<8x128xf32>
    %138 = arith.divf %136, %137 : vector<8x128xf32>
    %139 = math.tanh %133 : vector<8x128xf32>
    %140 = vector.extract_strided_slice %138 {offsets = [0, 0], sizes = [8, 32], strides = [1, 1]} : vector<8x128xf32> to vector<8x32xf32>
    %141 = vector.extract_strided_slice %138 {offsets = [0, 32], sizes = [8, 32], strides = [1, 1]} : vector<8x128xf32> to vector<8x32xf32>
    %142 = vector.extract_strided_slice %139 {offsets = [0, 64], sizes = [8, 32], strides = [1, 1]} : vector<8x128xf32> to vector<8x32xf32>
    %143 = vector.extract_strided_slice %138 {offsets = [0, 96], sizes = [8, 32], strides = [1, 1]} : vector<8x128xf32> to vector<8x32xf32>
    %144 = arith.mulf %141, %128 : vector<8x32xf32>
    %145 = arith.mulf %140, %142 : vector<8x32xf32>
    %146 = arith.addf %144, %145 : vector<8x32xf32>
    %147 = math.tanh %146 : vector<8x32xf32>
    %148 = arith.mulf %143, %147 : vector<8x32xf32>
    %c4_i32 = arith.constant 4 : i32
    %149 = arith.index_cast %c4_i32 : i32 to index
    %c0_71 = arith.constant 0 : index
    %c0_72 = arith.constant 0 : index
    %150 = vector.load %arg5[%149, %c0_71, %c0_72] : memref<8x8x128xf32, #tpu.memory_space<vmem>>, vector<1x8x128xf32>
    %151 = vector.shape_cast %150 : vector<1x8x128xf32> to vector<8x128xf32>
    %cst_73 = arith.constant dense<0.000000e+00> : vector<8x128xf32>
    %152 = tpu.matmul %146, %66, %cst_73 {dimension_numbers = #tpu.dot_dimension_numbers<[1], [0], [0], [1], [0, 0, 1, 1], [], []>} : vector<8x32xf32>, vector<32x128xf32>, vector<8x128xf32> -> vector<8x128xf32>
    %153 = arith.addf %151, %152 : vector<8x128xf32>
    %154 = arith.negf %153 : vector<8x128xf32>
    %155 = math.exp %154 : vector<8x128xf32>
    %cst_74 = arith.constant 1.000000e+00 : f32
    %156 = vector.broadcast %cst_74 : f32 to vector<8x128xf32>
    %157 = arith.addf %156, %155 : vector<8x128xf32>
    %158 = arith.divf %156, %157 : vector<8x128xf32>
    %159 = math.tanh %153 : vector<8x128xf32>
    %160 = vector.extract_strided_slice %158 {offsets = [0, 0], sizes = [8, 32], strides = [1, 1]} : vector<8x128xf32> to vector<8x32xf32>
    %161 = vector.extract_strided_slice %158 {offsets = [0, 32], sizes = [8, 32], strides = [1, 1]} : vector<8x128xf32> to vector<8x32xf32>
    %162 = vector.extract_strided_slice %159 {offsets = [0, 64], sizes = [8, 32], strides = [1, 1]} : vector<8x128xf32> to vector<8x32xf32>
    %163 = vector.extract_strided_slice %158 {offsets = [0, 96], sizes = [8, 32], strides = [1, 1]} : vector<8x128xf32> to vector<8x32xf32>
    %164 = arith.mulf %161, %148 : vector<8x32xf32>
    %165 = arith.mulf %160, %162 : vector<8x32xf32>
    %166 = arith.addf %164, %165 : vector<8x32xf32>
    %167 = math.tanh %166 : vector<8x32xf32>
    %168 = arith.mulf %163, %167 : vector<8x32xf32>
    %c5_i32 = arith.constant 5 : i32
    %169 = arith.index_cast %c5_i32 : i32 to index
    %c0_75 = arith.constant 0 : index
    %c0_76 = arith.constant 0 : index
    %170 = vector.load %arg5[%169, %c0_75, %c0_76] : memref<8x8x128xf32, #tpu.memory_space<vmem>>, vector<1x8x128xf32>
    %171 = vector.shape_cast %170 : vector<1x8x128xf32> to vector<8x128xf32>
    %cst_77 = arith.constant dense<0.000000e+00> : vector<8x128xf32>
    %172 = tpu.matmul %166, %66, %cst_77 {dimension_numbers = #tpu.dot_dimension_numbers<[1], [0], [0], [1], [0, 0, 1, 1], [], []>} : vector<8x32xf32>, vector<32x128xf32>, vector<8x128xf32> -> vector<8x128xf32>
    %173 = arith.addf %171, %172 : vector<8x128xf32>
    %174 = arith.negf %173 : vector<8x128xf32>
    %175 = math.exp %174 : vector<8x128xf32>
    %cst_78 = arith.constant 1.000000e+00 : f32
    %176 = vector.broadcast %cst_78 : f32 to vector<8x128xf32>
    %177 = arith.addf %176, %175 : vector<8x128xf32>
    %178 = arith.divf %176, %177 : vector<8x128xf32>
    %179 = math.tanh %173 : vector<8x128xf32>
    %180 = vector.extract_strided_slice %178 {offsets = [0, 0], sizes = [8, 32], strides = [1, 1]} : vector<8x128xf32> to vector<8x32xf32>
    %181 = vector.extract_strided_slice %178 {offsets = [0, 32], sizes = [8, 32], strides = [1, 1]} : vector<8x128xf32> to vector<8x32xf32>
    %182 = vector.extract_strided_slice %179 {offsets = [0, 64], sizes = [8, 32], strides = [1, 1]} : vector<8x128xf32> to vector<8x32xf32>
    %183 = vector.extract_strided_slice %178 {offsets = [0, 96], sizes = [8, 32], strides = [1, 1]} : vector<8x128xf32> to vector<8x32xf32>
    %184 = arith.mulf %181, %168 : vector<8x32xf32>
    %185 = arith.mulf %180, %182 : vector<8x32xf32>
    %186 = arith.addf %184, %185 : vector<8x32xf32>
    %187 = math.tanh %186 : vector<8x32xf32>
    %188 = arith.mulf %183, %187 : vector<8x32xf32>
    %c6_i32 = arith.constant 6 : i32
    %189 = arith.index_cast %c6_i32 : i32 to index
    %c0_79 = arith.constant 0 : index
    %c0_80 = arith.constant 0 : index
    %190 = vector.load %arg5[%189, %c0_79, %c0_80] : memref<8x8x128xf32, #tpu.memory_space<vmem>>, vector<1x8x128xf32>
    %191 = vector.shape_cast %190 : vector<1x8x128xf32> to vector<8x128xf32>
    %cst_81 = arith.constant dense<0.000000e+00> : vector<8x128xf32>
    %192 = tpu.matmul %186, %66, %cst_81 {dimension_numbers = #tpu.dot_dimension_numbers<[1], [0], [0], [1], [0, 0, 1, 1], [], []>} : vector<8x32xf32>, vector<32x128xf32>, vector<8x128xf32> -> vector<8x128xf32>
    %193 = arith.addf %191, %192 : vector<8x128xf32>
    %194 = arith.negf %193 : vector<8x128xf32>
    %195 = math.exp %194 : vector<8x128xf32>
    %cst_82 = arith.constant 1.000000e+00 : f32
    %196 = vector.broadcast %cst_82 : f32 to vector<8x128xf32>
    %197 = arith.addf %196, %195 : vector<8x128xf32>
    %198 = arith.divf %196, %197 : vector<8x128xf32>
    %199 = math.tanh %193 : vector<8x128xf32>
    %200 = vector.extract_strided_slice %198 {offsets = [0, 0], sizes = [8, 32], strides = [1, 1]} : vector<8x128xf32> to vector<8x32xf32>
    %201 = vector.extract_strided_slice %198 {offsets = [0, 32], sizes = [8, 32], strides = [1, 1]} : vector<8x128xf32> to vector<8x32xf32>
    %202 = vector.extract_strided_slice %199 {offsets = [0, 64], sizes = [8, 32], strides = [1, 1]} : vector<8x128xf32> to vector<8x32xf32>
    %203 = vector.extract_strided_slice %198 {offsets = [0, 96], sizes = [8, 32], strides = [1, 1]} : vector<8x128xf32> to vector<8x32xf32>
    %204 = arith.mulf %201, %188 : vector<8x32xf32>
    %205 = arith.mulf %200, %202 : vector<8x32xf32>
    %206 = arith.addf %204, %205 : vector<8x32xf32>
    %207 = math.tanh %206 : vector<8x32xf32>
    %208 = arith.mulf %203, %207 : vector<8x32xf32>
    %c7_i32 = arith.constant 7 : i32
    %209 = arith.index_cast %c7_i32 : i32 to index
    %c0_83 = arith.constant 0 : index
    %c0_84 = arith.constant 0 : index
    %210 = vector.load %arg5[%209, %c0_83, %c0_84] : memref<8x8x128xf32, #tpu.memory_space<vmem>>, vector<1x8x128xf32>
    %211 = vector.shape_cast %210 : vector<1x8x128xf32> to vector<8x128xf32>
    %cst_85 = arith.constant dense<0.000000e+00> : vector<8x128xf32>
    %212 = tpu.matmul %206, %66, %cst_85 {dimension_numbers = #tpu.dot_dimension_numbers<[1], [0], [0], [1], [0, 0, 1, 1], [], []>} : vector<8x32xf32>, vector<32x128xf32>, vector<8x128xf32> -> vector<8x128xf32>
    %213 = arith.addf %211, %212 : vector<8x128xf32>
    %214 = arith.negf %213 : vector<8x128xf32>
    %215 = math.exp %214 : vector<8x128xf32>
    %cst_86 = arith.constant 1.000000e+00 : f32
    %216 = vector.broadcast %cst_86 : f32 to vector<8x128xf32>
    %217 = arith.addf %216, %215 : vector<8x128xf32>
    %218 = arith.divf %216, %217 : vector<8x128xf32>
    %219 = math.tanh %213 : vector<8x128xf32>
    %220 = vector.extract_strided_slice %218 {offsets = [0, 0], sizes = [8, 32], strides = [1, 1]} : vector<8x128xf32> to vector<8x32xf32>
    %221 = vector.extract_strided_slice %218 {offsets = [0, 32], sizes = [8, 32], strides = [1, 1]} : vector<8x128xf32> to vector<8x32xf32>
    %222 = vector.extract_strided_slice %219 {offsets = [0, 64], sizes = [8, 32], strides = [1, 1]} : vector<8x128xf32> to vector<8x32xf32>
    %223 = vector.extract_strided_slice %218 {offsets = [0, 96], sizes = [8, 32], strides = [1, 1]} : vector<8x128xf32> to vector<8x32xf32>
    %224 = arith.mulf %221, %208 : vector<8x32xf32>
    %225 = arith.mulf %220, %222 : vector<8x32xf32>
    %226 = arith.addf %224, %225 : vector<8x32xf32>
    %227 = math.tanh %226 : vector<8x32xf32>
    %228 = arith.mulf %223, %227 : vector<8x32xf32>
    %c8_i32 = arith.constant 8 : i32
    %229 = vector.extract_strided_slice %226 {offsets = [0, 24], sizes = [8, 8], strides = [1, 1]} : vector<8x32xf32> to vector<8x8xf32>
    %c0_87 = arith.constant 0 : index
    %c0_88 = arith.constant 0 : index
    %230 = vector.load %arg4[%c0_87, %c0_88] : memref<8x8xf32, #tpu.memory_space<vmem>>, vector<8x8xf32>
    tpu.vector_store %arg4[%c0_87, %c0_88], %229 {strides = array<i32>} : memref<8x8xf32, #tpu.memory_space<vmem>>, vector<8x8xf32>,
    return
  }
}

</mosaic_0001>

<llo_original>
// kernel: lstm_forward.1
$region0: #{lstm_forward.1}
  #allocation0 [shape = 'u32[]', space=smem, size = 0x4, offset = 0x4, fixed_abs, tag = 'smem constant byte address 0x4 - core index']
  #allocation1 [shape = 'u32[72,128]{1,0:T(1,128)}', space=vmem, size = 0x9000, scoped, tag = 'internal scratch']
  #allocation2 [shape = 'f32[8,8,128]{2,1,0:T(8,128)}', space=vmem, size = 0x8000, scoped, tag = 'scratch operand']
  %s0 = inlined_call_operand.hbm [shape: f32[8,8,16], index: 0, kind: input, shape index: {}]
  %s1 = inlined_call_operand.hbm [shape: f32[16,128], index: 1, kind: input, shape index: {}]
  %s2 = inlined_call_operand.hbm [shape: f32[32,128], index: 2, kind: input, shape index: {}]
  %s3 = inlined_call_operand.vmem [shape: f32[1,128], index: 3, kind: input, shape index: {}]
  %s4 = inlined_call_operand.hbm [shape: f32[8,8], index: 4, kind: output, shape index: {}]
  %s5 = sld [smem:[#allocation0]]
  $region38: #{lstm_forward.1} parent=0
    _
  %s7 = ssub.s32 1, %s5
  %s8 = scalar_select 0, %s7, %s5
  $region1: #{lstm_forward.1} parent=0
    #allocation3 [shape = 'u8[32768]{0}', space=vmem, size = 0x8000, scoped, tag = 'input window, operand 0, single buffered']
    #allocation4 [shape = 's32[1]{0}', space=sflag, size = 0x4, scoped, tag = 'scoped memory for lstm_forward.1']
    #allocation5 [shape = 's32[1]{0}', space=sflag, size = 0x4, scoped, tag = 'scoped memory for lstm_forward.1']
    #allocation6 [shape = 'u8[8192]{0}', space=vmem, size = 0x2000, scoped, tag = 'input window, operand 1, single buffered']
    #allocation7 [shape = 's32[1]{0}', space=sflag, size = 0x4, scoped, tag = 'scoped memory for lstm_forward.1']
    #allocation8 [shape = 'u8[16384]{0}', space=vmem, size = 0x4000, scoped, tag = 'input window, operand 2, single buffered']
    #allocation9 [shape = 'u8[4096]{0}', space=vmem, size = 0x1000, scoped, tag = 'output window, operand 0, single buffered']
    %9 = vsyncpa [#allocation4], 0
    %10 = vsyncpa [#allocation7], 0
    %11 = vsyncpa [#allocation5], 0
    // Predicated region
    $region2: #{lstm_forward.1} parent=1 // pred_check
      _
    $region3: #{lstm_forward.1} parent=1 // pred_check_branch
      %13 = sbr.rel (0) target = $region5
    $region4: #{lstm_forward.1} parent=1 // pred_region
      %15 = vsyncadd [#allocation4], 0
      %s16 = sshll.u32 %s0, 4
      %s17 = int_to_ptr.hbm [resolvable:$true] %s16
      %s18 = sshll.u32 [#allocation3], 4
      %s19 = int_to_ptr.vmem [resolvable:$true] %s18
      %24 = dma.hbm_to_vmem [thread:$0]  %s17, 1024, %s19, [#allocation4], 128, 128, 8
    $region5: #{lstm_forward.1} parent=1 // pred_fallthru
      _
    // Predicated region
    $region6: #{lstm_forward.1} parent=1 // pred_check
      _
    $region7: #{lstm_forward.1} parent=1 // pred_check_branch
      %26 = sbr.rel (0) target = $region9
    $region8: #{lstm_forward.1} parent=1 // pred_region
      %28 = vsyncadd [#allocation7], 0
      %s29 = sshll.u32 %s1, 4
      %s30 = int_to_ptr.hbm [resolvable:$true] %s29
      %s31 = sshll.u32 [#allocation6], 4
      %s32 = int_to_ptr.vmem [resolvable:$true] %s31
      %37 = dma.hbm_to_vmem [thread:$0]  %s30, 256, %s32, [#allocation7], 128, 128, 8
    $region9: #{lstm_forward.1} parent=1 // pred_fallthru
      _
    // Predicated region
    $region10: #{lstm_forward.1} parent=1 // pred_check
      _
    $region11: #{lstm_forward.1} parent=1 // pred_check_branch
      %39 = sbr.rel (0) target = $region13
    $region12: #{lstm_forward.1} parent=1 // pred_region
      %41 = vsyncadd [#allocation7], 0
      %s42 = sshll.u32 %s2, 4
      %s43 = int_to_ptr.hbm [resolvable:$true] %s42
      %s44 = sshll.u32 [#allocation8], 4
      %s45 = int_to_ptr.vmem [resolvable:$true] %s44
      %50 = dma.hbm_to_vmem [thread:$0]  %s43, 512, %s45, [#allocation7], 128, 128, 8
    $region13: #{lstm_forward.1} parent=1 // pred_fallthru
      _
    // Predicated region
    $region14: #{lstm_forward.1} parent=1 // pred_check
      _
    $region15: #{lstm_forward.1} parent=1 // pred_check_branch
      %52 = sbr.rel (0) target = $region17
    $region16: #{lstm_forward.1} parent=1 // pred_region
      _
    $region17: #{lstm_forward.1} parent=1 // pred_fallthru
      _
    // Predicated region
    $region18: #{lstm_forward.1} parent=1 // pred_check
      _
    $region19: #{lstm_forward.1} parent=1 // pred_check_branch
      %54 = sbr.rel (0) target = $region21
    $region20: #{lstm_forward.1} parent=1 // pred_region
      %56 = dma.done [#allocation4], 1024
    $region21: #{lstm_forward.1} parent=1 // pred_fallthru
      _
    // Predicated region
    $region22: #{lstm_forward.1} parent=1 // pred_check
      _
    $region23: #{lstm_forward.1} parent=1 // pred_check_branch
      %58 = sbr.rel (0) target = $region25
    $region24: #{lstm_forward.1} parent=1 // pred_region
      %60 = dma.done [#allocation7], 256
    $region25: #{lstm_forward.1} parent=1 // pred_fallthru
      _
    // Predicated region
    $region26: #{lstm_forward.1} parent=1 // pred_check
      _
    $region27: #{lstm_forward.1} parent=1 // pred_check_branch
      %62 = sbr.rel (0) target = $region29
    $region28: #{lstm_forward.1} parent=1 // pred_region
      %64 = dma.done [#allocation7], 512
    $region29: #{lstm_forward.1} parent=1 // pred_fallthru
      _
    %v65 = vld [vmem:[#allocation6] sm:$0xff]
    %v66 = vld [vmem:[#allocation6 + $0x8] sm:$0xff]
    %v67 = vld [vmem:[%s3] sm:$0x1]
    %v68 = vld [vmem:[#allocation3] sm:$0x1]
    %v69 = vld [vmem:[#allocation3 + $0x8] sm:$0x1]
    %v70 = vld [vmem:[#allocation3 + $0x10] sm:$0x1]
    %v71 = vld [vmem:[#allocation3 + $0x18] sm:$0x1]
    %v72 = vld [vmem:[#allocation3 + $0x20] sm:$0x1]
    %v73 = vld [vmem:[#allocation3 + $0x28] sm:$0x1]
    %v74 = vld [vmem:[#allocation3 + $0x30] sm:$0x1]
    %v75 = vld [vmem:[#allocation3 + $0x38] sm:$0x1]
    %v77 = vperm.slane %v67, 0
    %v87 = vrot.slane %v69, 7
    %vm88 = vcmask 1041409
    %v89 = vsel %vm88, %v87, %v68
    %v90 = vrot.slane %v70, 6
    %vm91 = vcmask 1042434
    %v92 = vsel %vm91, %v90, %v89
    %v93 = vrot.slane %v71, 5
    %vm94 = vcmask 1043459
    %v95 = vsel %vm94, %v93, %v92
    %v96 = vrot.slane %v72, 4
    %vm97 = vcmask 1044484
    %v98 = vsel %vm97, %v96, %v95
    %v99 = vrot.slane %v73, 3
    %vm100 = vcmask 1045509
    %v101 = vsel %vm100, %v99, %v98
    %v102 = vrot.slane %v74, 2
    %vm103 = vcmask 1046534
    %v104 = vsel %vm103, %v102, %v101
    %v105 = vrot.slane %v75, 1
    %vm106 = vcmask 1047559
    %v107 = vsel %vm106, %v105, %v104
    %vm108 = vcmask 130048
    %v109 = vsel %vm108, %v107, 0
    %111 = vmatpush.msra.mxu0 0.0
    %112 = vmatpush.msra.mxu0 0.0
    %113 = vmatpush.msra.mxu0 0.0
    %114 = vmatpush.msra.mxu0 0.0
    %115 = vmatpush.msra.mxu0 0.0
    %116 = vmatpush.msra.mxu0 0.0
    %117 = vmatpush.msra.mxu0 0.0
    %118 = vmatpush.msra.mxu0 0.0
    %119 = vmatpush.msra.mxu0 0.0
    %120 = vmatpush.msra.mxu0 0.0
    %121 = vmatpush.msra.mxu0 0.0
    %122 = vmatpush.msra.mxu0 0.0
    %123 = vmatpush.msra.mxu0 0.0
    %124 = vmatpush.msra.mxu0 0.0
    %125 = vmatpush.msra.mxu0 %v66
    %126 = vmatpush.msra.mxu0 %v65
    %127 = vmatmul.f32.gmra.mxu0 %v109
    %v128 = vpop.f32.mrf.mxu0
    %v129 = vadd.f32 %v77, %v128
    %130 = vdwg.mxu0
    %131 = vst [vmem:[#allocation2] sm:$0xff] %v129
    %v132 = vld [vmem:[#allocation3 + $0x1] sm:$0x1]
    %v133 = vld [vmem:[#allocation3 + $0x9] sm:$0x1]
    %v134 = vld [vmem:[#allocation3 + $0x11] sm:$0x1]
    %v135 = vld [vmem:[#allocation3 + $0x19] sm:$0x1]
    %v136 = vld [vmem:[#allocation3 + $0x21] sm:$0x1]
    %v137 = vld [vmem:[#allocation3 + $0x29] sm:$0x1]
    %v138 = vld [vmem:[#allocation3 + $0x31] sm:$0x1]
    %v139 = vld [vmem:[#allocation3 + $0x39] sm:$0x1]
    %v148 = vrot.slane %v133, 7
    %v149 = vsel %vm88, %v148, %v132
    %v150 = vrot.slane %v134, 6
    %v151 = vsel %vm91, %v150, %v149
    %v152 = vrot.slane %v135, 5
    %v153 = vsel %vm94, %v152, %v151
    %v154 = vrot.slane %v136, 4
    %v155 = vsel %vm97, %v154, %v153
    %v156 = vrot.slane %v137, 3
    %v157 = vsel %vm100, %v156, %v155
    %v158 = vrot.slane %v138, 2
    %v159 = vsel %vm103, %v158, %v157
    %v160 = vrot.slane %v139, 1
    %v161 = vsel %vm106, %v160, %v159
    %v162 = vsel %vm108, %v161, 0
    %164 = vmatpush.msra.mxu0 0.0
    %165 = vmatpush.msra.mxu0 0.0
    %166 = vmatpush.msra.mxu0 0.0
    %167 = vmatpush.msra.mxu0 0.0
    %168 = vmatpush.msra.mxu0 0.0
    %169 = vmatpush.msra.mxu0 0.0
    %170 = vmatpush.msra.mxu0 0.0
    %171 = vmatpush.msra.mxu0 0.0
    %172 = vmatpush.msra.mxu0 0.0
    %173 = vmatpush.msra.mxu0 0.0
    %174 = vmatpush.msra.mxu0 0.0
    %175 = vmatpush.msra.mxu0 0.0
    %176 = vmatpush.msra.mxu0 0.0
    %177 = vmatpush.msra.mxu0 0.0
    %178 = vmatpush.msra.mxu0 %v66
    %179 = vmatpush.msra.mxu0 %v65
    %180 = vmatmul.f32.gmra.mxu0 %v162
    %v181 = vpop.f32.mrf.mxu0
    %v182 = vadd.f32 %v77, %v181
    %183 = vdwg.mxu0
    %s184 = scalar_lea.vmem [#allocation2], 8
    %185 = vst [vmem:[%s184] sm:$0xff] %v182
    %v186 = vld [vmem:[#allocation3 + $0x2] sm:$0x1]
    %v187 = vld [vmem:[#allocation3 + $0xa] sm:$0x1]
    %v188 = vld [vmem:[#allocation3 + $0x12] sm:$0x1]
    %v189 = vld [vmem:[#allocation3 + $0x1a] sm:$0x1]
    %v190 = vld [vmem:[#allocation3 + $0x22] sm:$0x1]
    %v191 = vld [vmem:[#allocation3 + $0x2a] sm:$0x1]
    %v192 = vld [vmem:[#allocation3 + $0x32] sm:$0x1]
    %v193 = vld [vmem:[#allocation3 + $0x3a] sm:$0x1]
    %v202 = vrot.slane %v187, 7
    %v203 = vsel %vm88, %v202, %v186
    %v204 = vrot.slane %v188, 6
    %v205 = vsel %vm91, %v204, %v203
    %v206 = vrot.slane %v189, 5
    %v207 = vsel %vm94, %v206, %v205
    %v208 = vrot.slane %v190, 4
    %v209 = vsel %vm97, %v208, %v207
    %v210 = vrot.slane %v191, 3
    %v211 = vsel %vm100, %v210, %v209
    %v212 = vrot.slane %v192, 2
    %v213 = vsel %vm103, %v212, %v211
    %v214 = vrot.slane %v193, 1
    %v215 = vsel %vm106, %v214, %v213
    %v216 = vsel %vm108, %v215, 0
    %218 = vmatpush.msra.mxu0 0.0
    %219 = vmatpush.msra.mxu0 0.0
    %220 = vmatpush.msra.mxu0 0.0
    %221 = vmatpush.msra.mxu0 0.0
    %222 = vmatpush.msra.mxu0 0.0
    %223 = vmatpush.msra.mxu0 0.0
    %224 = vmatpush.msra.mxu0 0.0
    %225 = vmatpush.msra.mxu0 0.0
    %226 = vmatpush.msra.mxu0 0.0
    %227 = vmatpush.msra.mxu0 0.0
    %228 = vmatpush.msra.mxu0 0.0
    %229 = vmatpush.msra.mxu0 0.0
    %230 = vmatpush.msra.mxu0 0.0
    %231 = vmatpush.msra.mxu0 0.0
    %232 = vmatpush.msra.mxu0 %v66
    %233 = vmatpush.msra.mxu0 %v65
    %234 = vmatmul.f32.gmra.mxu0 %v216
    %v235 = vpop.f32.mrf.mxu0
    %v236 = vadd.f32 %v77, %v235
    %237 = vdwg.mxu0
    %s238 = scalar_lea.vmem [#allocation2], 16
    %239 = vst [vmem:[%s238] sm:$0xff] %v236
    %v240 = vld [vmem:[#allocation3 + $0x3] sm:$0x1]
    %v241 = vld [vmem:[#allocation3 + $0xb] sm:$0x1]
    %v242 = vld [vmem:[#allocation3 + $0x13] sm:$0x1]
    %v243 = vld [vmem:[#allocation3 + $0x1b] sm:$0x1]
    %v244 = vld [vmem:[#allocation3 + $0x23] sm:$0x1]
    %v245 = vld [vmem:[#allocation3 + $0x2b] sm:$0x1]
    %v246 = vld [vmem:[#allocation3 + $0x33] sm:$0x1]
    %v247 = vld [vmem:[#allocation3 + $0x3b] sm:$0x1]
    %v256 = vrot.slane %v241, 7
    %v257 = vsel %vm88, %v256, %v240
    %v258 = vrot.slane %v242, 6
    %v259 = vsel %vm91, %v258, %v257
    %v260 = vrot.slane %v243, 5
    %v261 = vsel %vm94, %v260, %v259
    %v262 = vrot.slane %v244, 4
    %v263 = vsel %vm97, %v262, %v261
    %v264 = vrot.slane %v245, 3
    %v265 = vsel %vm100, %v264, %v263
    %v266 = vrot.slane %v246, 2
    %v267 = vsel %vm103, %v266, %v265
    %v268 = vrot.slane %v247, 1
    %v269 = vsel %vm106, %v268, %v267
    %v270 = vsel %vm108, %v269, 0
    %272 = vmatpush.msra.mxu0 0.0
    %273 = vmatpush.msra.mxu0 0.0
    %274 = vmatpush.msra.mxu0 0.0
    %275 = vmatpush.msra.mxu0 0.0
    %276 = vmatpush.msra.mxu0 0.0
    %277 = vmatpush.msra.mxu0 0.0
    %278 = vmatpush.msra.mxu0 0.0
    %279 = vmatpush.msra.mxu0 0.0
    %280 = vmatpush.msra.mxu0 0.0
    %281 = vmatpush.msra.mxu0 0.0
    %282 = vmatpush.msra.mxu0 0.0
    %283 = vmatpush.msra.mxu0 0.0
    %284 = vmatpush.msra.mxu0 0.0
    %285 = vmatpush.msra.mxu0 0.0
    %286 = vmatpush.msra.mxu0 %v66
    %287 = vmatpush.msra.mxu0 %v65
    %288 = vmatmul.f32.gmra.mxu0 %v270
    %v289 = vpop.f32.mrf.mxu0
    %v290 = vadd.f32 %v77, %v289
    %291 = vdwg.mxu0
    %s292 = scalar_lea.vmem [#allocation2], 24
    %293 = vst [vmem:[%s292] sm:$0xff] %v290
    %v294 = vld [vmem:[#allocation3 + $0x4] sm:$0x1]
    %v295 = vld [vmem:[#allocation3 + $0xc] sm:$0x1]
    %v296 = vld [vmem:[#allocation3 + $0x14] sm:$0x1]
    %v297 = vld [vmem:[#allocation3 + $0x1c] sm:$0x1]
    %v298 = vld [vmem:[#allocation3 + $0x24] sm:$0x1]
    %v299 = vld [vmem:[#allocation3 + $0x2c] sm:$0x1]
    %v300 = vld [vmem:[#allocation3 + $0x34] sm:$0x1]
    %v301 = vld [vmem:[#allocation3 + $0x3c] sm:$0x1]
    %v310 = vrot.slane %v295, 7
    %v311 = vsel %vm88, %v310, %v294
    %v312 = vrot.slane %v296, 6
    %v313 = vsel %vm91, %v312, %v311
    %v314 = vrot.slane %v297, 5
    %v315 = vsel %vm94, %v314, %v313
    %v316 = vrot.slane %v298, 4
    %v317 = vsel %vm97, %v316, %v315
    %v318 = vrot.slane %v299, 3
    %v319 = vsel %vm100, %v318, %v317
    %v320 = vrot.slane %v300, 2
    %v321 = vsel %vm103, %v320, %v319
    %v322 = vrot.slane %v301, 1
    %v323 = vsel %vm106, %v322, %v321
    %v324 = vsel %vm108, %v323, 0
    %326 = vmatpush.msra.mxu0 0.0
    %327 = vmatpush.msra.mxu0 0.0
    %328 = vmatpush.msra.mxu0 0.0
    %329 = vmatpush.msra.mxu0 0.0
    %330 = vmatpush.msra.mxu0 0.0
    %331 = vmatpush.msra.mxu0 0.0
    %332 = vmatpush.msra.mxu0 0.0
    %333 = vmatpush.msra.mxu0 0.0
    %334 = vmatpush.msra.mxu0 0.0
    %335 = vmatpush.msra.mxu0 0.0
    %336 = vmatpush.msra.mxu0 0.0
    %337 = vmatpush.msra.mxu0 0.0
    %338 = vmatpush.msra.mxu0 0.0
    %339 = vmatpush.msra.mxu0 0.0
    %340 = vmatpush.msra.mxu0 %v66
    %341 = vmatpush.msra.mxu0 %v65
    %342 = vmatmul.f32.gmra.mxu0 %v324
    %v343 = vpop.f32.mrf.mxu0
    %v344 = vadd.f32 %v77, %v343
    %345 = vdwg.mxu0
    %s346 = scalar_lea.vmem [#allocation2], 32
    %347 = vst [vmem:[%s346] sm:$0xff] %v344
    %v348 = vld [vmem:[#allocation3 + $0x5] sm:$0x1]
    %v349 = vld [vmem:[#allocation3 + $0xd] sm:$0x1]
    %v350 = vld [vmem:[#allocation3 + $0x15] sm:$0x1]
    %v351 = vld [vmem:[#allocation3 + $0x1d] sm:$0x1]
    %v352 = vld [vmem:[#allocation3 + $0x25] sm:$0x1]
    %v353 = vld [vmem:[#allocation3 + $0x2d] sm:$0x1]
    %v354 = vld [vmem:[#allocation3 + $0x35] sm:$0x1]
    %v355 = vld [vmem:[#allocation3 + $0x3d] sm:$0x1]
    %v364 = vrot.slane %v349, 7
    %v365 = vsel %vm88, %v364, %v348
    %v366 = vrot.slane %v350, 6
    %v367 = vsel %vm91, %v366, %v365
    %v368 = vrot.slane %v351, 5
    %v369 = vsel %vm94, %v368, %v367
    %v370 = vrot.slane %v352, 4
    %v371 = vsel %vm97, %v370, %v369
    %v372 = vrot.slane %v353, 3
    %v373 = vsel %vm100, %v372, %v371
    %v374 = vrot.slane %v354, 2
    %v375 = vsel %vm103, %v374, %v373
    %v376 = vrot.slane %v355, 1
    %v377 = vsel %vm106, %v376, %v375
    %v378 = vsel %vm108, %v377, 0
    %380 = vmatpush.msra.mxu0 0.0
    %381 = vmatpush.msra.mxu0 0.0
    %382 = vmatpush.msra.mxu0 0.0
    %383 = vmatpush.msra.mxu0 0.0
    %384 = vmatpush.msra.mxu0 0.0
    %385 = vmatpush.msra.mxu0 0.0
    %386 = vmatpush.msra.mxu0 0.0
    %387 = vmatpush.msra.mxu0 0.0
    %388 = vmatpush.msra.mxu0 0.0
    %389 = vmatpush.msra.mxu0 0.0
    %390 = vmatpush.msra.mxu0 0.0
    %391 = vmatpush.msra.mxu0 0.0
    %392 = vmatpush.msra.mxu0 0.0
    %393 = vmatpush.msra.mxu0 0.0
    %394 = vmatpush.msra.mxu0 %v66
    %395 = vmatpush.msra.mxu0 %v65
    %396 = vmatmul.f32.gmra.mxu0 %v378
    %v397 = vpop.f32.mrf.mxu0
    %v398 = vadd.f32 %v77, %v397
    %399 = vdwg.mxu0
    %s400 = scalar_lea.vmem [#allocation2], 40
    %401 = vst [vmem:[%s400] sm:$0xff] %v398
    %v402 = vld [vmem:[#allocation3 + $0x6] sm:$0x1]
    %v403 = vld [vmem:[#allocation3 + $0xe] sm:$0x1]
    %v404 = vld [vmem:[#allocation3 + $0x16] sm:$0x1]
    %v405 = vld [vmem:[#allocation3 + $0x1e] sm:$0x1]
    %v406 = vld [vmem:[#allocation3 + $0x26] sm:$0x1]
    %v407 = vld [vmem:[#allocation3 + $0x2e] sm:$0x1]
    %v408 = vld [vmem:[#allocation3 + $0x36] sm:$0x1]
    %v409 = vld [vmem:[#allocation3 + $0x3e] sm:$0x1]
    %v418 = vrot.slane %v403, 7
    %v419 = vsel %vm88, %v418, %v402
    %v420 = vrot.slane %v404, 6
    %v421 = vsel %vm91, %v420, %v419
    %v422 = vrot.slane %v405, 5
    %v423 = vsel %vm94, %v422, %v421
    %v424 = vrot.slane %v406, 4
    %v425 = vsel %vm97, %v424, %v423
    %v426 = vrot.slane %v407, 3
    %v427 = vsel %vm100, %v426, %v425
    %v428 = vrot.slane %v408, 2
    %v429 = vsel %vm103, %v428, %v427
    %v430 = vrot.slane %v409, 1
    %v431 = vsel %vm106, %v430, %v429
    %v432 = vsel %vm108, %v431, 0
    %434 = vmatpush.msra.mxu0 0.0
    %435 = vmatpush.msra.mxu0 0.0
    %436 = vmatpush.msra.mxu0 0.0
    %437 = vmatpush.msra.mxu0 0.0
    %438 = vmatpush.msra.mxu0 0.0
    %439 = vmatpush.msra.mxu0 0.0
    %440 = vmatpush.msra.mxu0 0.0
    %441 = vmatpush.msra.mxu0 0.0
    %442 = vmatpush.msra.mxu0 0.0
    %443 = vmatpush.msra.mxu0 0.0
    %444 = vmatpush.msra.mxu0 0.0
    %445 = vmatpush.msra.mxu0 0.0
    %446 = vmatpush.msra.mxu0 0.0
    %447 = vmatpush.msra.mxu0 0.0
    %448 = vmatpush.msra.mxu0 %v66
    %449 = vmatpush.msra.mxu0 %v65
    %450 = vmatmul.f32.gmra.mxu0 %v432
    %v451 = vpop.f32.mrf.mxu0
    %v452 = vadd.f32 %v77, %v451
    %453 = vdwg.mxu0
    %s454 = scalar_lea.vmem [#allocation2], 48
    %455 = vst [vmem:[%s454] sm:$0xff] %v452
    %v456 = vld [vmem:[#allocation3 + $0x7] sm:$0x1]
    %v457 = vld [vmem:[#allocation3 + $0xf] sm:$0x1]
    %v458 = vld [vmem:[#allocation3 + $0x17] sm:$0x1]
    %v459 = vld [vmem:[#allocation3 + $0x1f] sm:$0x1]
    %v460 = vld [vmem:[#allocation3 + $0x27] sm:$0x1]
    %v461 = vld [vmem:[#allocation3 + $0x2f] sm:$0x1]
    %v462 = vld [vmem:[#allocation3 + $0x37] sm:$0x1]
    %v463 = vld [vmem:[#allocation3 + $0x3f] sm:$0x1]
    %v472 = vrot.slane %v457, 7
    %v473 = vsel %vm88, %v472, %v456
    %v474 = vrot.slane %v458, 6
    %v475 = vsel %vm91, %v474, %v473
    %v476 = vrot.slane %v459, 5
    %v477 = vsel %vm94, %v476, %v475
    %v478 = vrot.slane %v460, 4
    %v479 = vsel %vm97, %v478, %v477
    %v480 = vrot.slane %v461, 3
    %v481 = vsel %vm100, %v480, %v479
    %v482 = vrot.slane %v462, 2
    %v483 = vsel %vm103, %v482, %v481
    %v484 = vrot.slane %v463, 1
    %v485 = vsel %vm106, %v484, %v483
    %v486 = vsel %vm108, %v485, 0
    %488 = vmatpush.msra.mxu0 0.0
    %489 = vmatpush.msra.mxu0 0.0
    %490 = vmatpush.msra.mxu0 0.0
    %491 = vmatpush.msra.mxu0 0.0
    %492 = vmatpush.msra.mxu0 0.0
    %493 = vmatpush.msra.mxu0 0.0
    %494 = vmatpush.msra.mxu0 0.0
    %495 = vmatpush.msra.mxu0 0.0
    %496 = vmatpush.msra.mxu0 0.0
    %497 = vmatpush.msra.mxu0 0.0
    %498 = vmatpush.msra.mxu0 0.0
    %499 = vmatpush.msra.mxu0 0.0
    %500 = vmatpush.msra.mxu0 0.0
    %501 = vmatpush.msra.mxu0 0.0
    %502 = vmatpush.msra.mxu0 %v66
    %503 = vmatpush.msra.mxu0 %v65
    %504 = vmatmul.f32.gmra.mxu0 %v486
    %v505 = vpop.f32.mrf.mxu0
    %v506 = vadd.f32 %v77, %v505
    %507 = vdwg.mxu0
    %s508 = scalar_lea.vmem [#allocation2], 56
    %509 = vst [vmem:[%s508] sm:$0xff] %v506
    %v510 = vld [vmem:[#allocation8] sm:$0xff]
    %v511 = vld [vmem:[#allocation8 + $0x8] sm:$0xff]
    %v512 = vld [vmem:[#allocation8 + $0x10] sm:$0xff]
    %v513 = vld [vmem:[#allocation8 + $0x18] sm:$0xff]
    %v514 = vld [vmem:[#allocation2] sm:$0xff]
    %vm515 = vcmask 261120
    %v517 = vsel %vm515, 0.0, 0
    %519 = vmatpush.msra.mxu0 0.0
    %520 = vmatpush.msra.mxu0 0.0
    %521 = vmatpush.msra.mxu0 0.0
    %522 = vmatpush.msra.mxu0 0.0
    %523 = vmatpush.msra.mxu0 0.0
    %524 = vmatpush.msra.mxu0 0.0
    %525 = vmatpush.msra.mxu0 0.0
    %526 = vmatpush.msra.mxu0 0.0
    %527 = vmatpush.msra.mxu0 0.0
    %528 = vmatpush.msra.mxu0 0.0
    %529 = vmatpush.msra.mxu0 0.0
    %530 = vmatpush.msra.mxu0 0.0
    %531 = vmatpush.msra.mxu0 %v513
    %532 = vmatpush.msra.mxu0 %v512
    %533 = vmatpush.msra.mxu0 %v511
    %534 = vmatpush.msra.mxu0 %v510
    %535 = vmatmul.f32.gmra.mxu0 %v517
    %v536 = vpop.f32.mrf.mxu0
    %v537 = vadd.f32 0.0, %v536
    %538 = vdwg.mxu0
    %v539 = vadd.f32 %v514, %v537
    %v540 = vxor.u32 %v539, 2147483648
    %v541 = vmul.f32 %v540, 1.442695
    %v542 = vpow.pop %v541
    %v543 = vadd.f32 %v542, 1.0
    %v544 = vrcp.pop %v543
    %v545 = vmul.f32 %v543, %v544
    %v546 = vsub.f32 1.0, %v545
    %v547 = vmul.f32 %v544, %v546
    %v548 = vadd.f32 %v544, %v547
    %vm549 = vweird.f32 %v543
    %vm550 = vweird.f32 %v544
    %vm551 = vmor %vm549, %vm550
    %v552 = vsel %vm551, %v544, %v548
    %v553 = vand.u32 2147483647, %v543
    %vm554 = vcmp.eq.f32.partialorder %v553, 8.507059e+37
    %v555 = vand.u32 %v543, 2147483648
    %v556 = vor.u32 1.1754944e-38, %v555
    %v557 = vsel %vm554, %v556, %v552
    %v558 = vmul.f32 1.0, %v557
    %v559 = vtanh.pop %v539
    %v560 = vmul.f32 %v558, 0.0
    %562 = vrot.lane.b32.xlu0 %v559, 64
    %v563 = vpop.permute.xlu0 %562
    %v565 = vmul.f32 %v558, %v563
    %567 = vrot.lane.b32.xlu0 %v565, 32
    %v568 = vpop.permute.xlu0 %567
    %v570 = vadd.f32 %v560, %v568
    %v571 = vtanh.pop %v570
    %573 = vrot.lane.b32.xlu0 %v571, 64
    %v574 = vpop.permute.xlu0 %573
    %v576 = vmul.f32 %v558, %v574
    %v577 = vld [vmem:[%s184] sm:$0xff]
    %579 = vrot.lane.b32.xlu0 %v570, 96
    %v580 = vpop.permute.xlu0 %579
    %v581 = vsel %vm515, %v580, 0
    %583 = vmatpush.msra.mxu0 0.0
    %584 = vmatpush.msra.mxu0 0.0
    %585 = vmatpush.msra.mxu0 0.0
    %586 = vmatpush.msra.mxu0 0.0
    %587 = vmatpush.msra.mxu0 0.0
    %588 = vmatpush.msra.mxu0 0.0
    %589 = vmatpush.msra.mxu0 0.0
    %590 = vmatpush.msra.mxu0 0.0
    %591 = vmatpush.msra.mxu0 0.0
    %592 = vmatpush.msra.mxu0 0.0
    %593 = vmatpush.msra.mxu0 0.0
    %594 = vmatpush.msra.mxu0 0.0
    %595 = vmatpush.msra.mxu0 %v513
    %596 = vmatpush.msra.mxu0 %v512
    %597 = vmatpush.msra.mxu0 %v511
    %598 = vmatpush.msra.mxu0 %v510
    %599 = vmatmul.f32.gmra.mxu0 %v581
    %v600 = vpop.f32.mrf.mxu0
    %v601 = vadd.f32 0.0, %v600
    %602 = vdwg.mxu0
    %v603 = vadd.f32 %v577, %v601
    %v604 = vxor.u32 %v603, 2147483648
    %v605 = vmul.f32 %v604, 1.442695
    %v606 = vpow.pop %v605
    %v607 = vadd.f32 %v606, 1.0
    %v608 = vrcp.pop %v607
    %v609 = vmul.f32 %v607, %v608
    %v610 = vsub.f32 1.0, %v609
    %v611 = vmul.f32 %v608, %v610
    %v612 = vadd.f32 %v608, %v611
    %vm613 = vweird.f32 %v607
    %vm614 = vweird.f32 %v608
    %vm615 = vmor %vm613, %vm614
    %v616 = vsel %vm615, %v608, %v612
    %v617 = vand.u32 2147483647, %v607
    %vm618 = vcmp.eq.f32.partialorder %v617, 8.507059e+37
    %v619 = vand.u32 %v607, 2147483648
    %v620 = vor.u32 1.1754944e-38, %v619
    %v621 = vsel %vm618, %v620, %v616
    %v622 = vmul.f32 1.0, %v621
    %v623 = vtanh.pop %v603
    %625 = vrot.lane.b32.xlu0 %v576, 64
    %v626 = vpop.permute.xlu0 %625
    %v628 = vmul.f32 %v622, %v626
    %630 = vrot.lane.b32.xlu0 %v623, 64
    %v631 = vpop.permute.xlu0 %630
    %v633 = vmul.f32 %v622, %v631
    %635 = vrot.lane.b32.xlu0 %v633, 32
    %v636 = vpop.permute.xlu0 %635
    %v638 = vadd.f32 %v628, %v636
    %v639 = vtanh.pop %v638
    %641 = vrot.lane.b32.xlu0 %v639, 64
    %v642 = vpop.permute.xlu0 %641
    %v644 = vmul.f32 %v622, %v642
    %v645 = vld [vmem:[%s238] sm:$0xff]
    %647 = vrot.lane.b32.xlu0 %v638, 96
    %v648 = vpop.permute.xlu0 %647
    %v649 = vsel %vm515, %v648, 0
    %651 = vmatpush.msra.mxu0 0.0
    %652 = vmatpush.msra.mxu0 0.0
    %653 = vmatpush.msra.mxu0 0.0
    %654 = vmatpush.msra.mxu0 0.0
    %655 = vmatpush.msra.mxu0 0.0
    %656 = vmatpush.msra.mxu0 0.0
    %657 = vmatpush.msra.mxu0 0.0
    %658 = vmatpush.msra.mxu0 0.0
    %659 = vmatpush.msra.mxu0 0.0
    %660 = vmatpush.msra.mxu0 0.0
    %661 = vmatpush.msra.mxu0 0.0
    %662 = vmatpush.msra.mxu0 0.0
    %663 = vmatpush.msra.mxu0 %v513
    %664 = vmatpush.msra.mxu0 %v512
    %665 = vmatpush.msra.mxu0 %v511
    %666 = vmatpush.msra.mxu0 %v510
    %667 = vmatmul.f32.gmra.mxu0 %v649
    %v668 = vpop.f32.mrf.mxu0
    %v669 = vadd.f32 0.0, %v668
    %670 = vdwg.mxu0
    %v671 = vadd.f32 %v645, %v669
    %v672 = vxor.u32 %v671, 2147483648
    %v673 = vmul.f32 %v672, 1.442695
    %v674 = vpow.pop %v673
    %v675 = vadd.f32 %v674, 1.0
    %v676 = vrcp.pop %v675
    %v677 = vmul.f32 %v675, %v676
    %v678 = vsub.f32 1.0, %v677
    %v679 = vmul.f32 %v676, %v678
    %v680 = vadd.f32 %v676, %v679
    %vm681 = vweird.f32 %v675
    %vm682 = vweird.f32 %v676
    %vm683 = vmor %vm681, %vm682
    %v684 = vsel %vm683, %v676, %v680
    %v685 = vand.u32 2147483647, %v675
    %vm686 = vcmp.eq.f32.partialorder %v685, 8.507059e+37
    %v687 = vand.u32 %v675, 2147483648
    %v688 = vor.u32 1.1754944e-38, %v687
    %v689 = vsel %vm686, %v688, %v684
    %v690 = vmul.f32 1.0, %v689
    %v691 = vtanh.pop %v671
    %693 = vrot.lane.b32.xlu0 %v644, 64
    %v694 = vpop.permute.xlu0 %693
    %v696 = vmul.f32 %v690, %v694
    %698 = vrot.lane.b32.xlu0 %v691, 64
    %v699 = vpop.permute.xlu0 %698
    %v701 = vmul.f32 %v690, %v699
    %703 = vrot.lane.b32.xlu0 %v701, 32
    %v704 = vpop.permute.xlu0 %703
    %v706 = vadd.f32 %v696, %v704
    %v707 = vtanh.pop %v706
    %709 = vrot.lane.b32.xlu0 %v707, 64
    %v710 = vpop.permute.xlu0 %709
    %v712 = vmul.f32 %v690, %v710
    %v713 = vld [vmem:[%s292] sm:$0xff]
    %715 = vrot.lane.b32.xlu0 %v706, 96
    %v716 = vpop.permute.xlu0 %715
    %v717 = vsel %vm515, %v716, 0
    %719 = vmatpush.msra.mxu0 0.0
    %720 = vmatpush.msra.mxu0 0.0
    %721 = vmatpush.msra.mxu0 0.0
    %722 = vmatpush.msra.mxu0 0.0
    %723 = vmatpush.msra.mxu0 0.0
    %724 = vmatpush.msra.mxu0 0.0
    %725 = vmatpush.msra.mxu0 0.0
    %726 = vmatpush.msra.mxu0 0.0
    %727 = vmatpush.msra.mxu0 0.0
    %728 = vmatpush.msra.mxu0 0.0
    %729 = vmatpush.msra.mxu0 0.0
    %730 = vmatpush.msra.mxu0 0.0
    %731 = vmatpush.msra.mxu0 %v513
    %732 = vmatpush.msra.mxu0 %v512
    %733 = vmatpush.msra.mxu0 %v511
    %734 = vmatpush.msra.mxu0 %v510
    %735 = vmatmul.f32.gmra.mxu0 %v717
    %v736 = vpop.f32.mrf.mxu0
    %v737 = vadd.f32 0.0, %v736
    %738 = vdwg.mxu0
    %v739 = vadd.f32 %v713, %v737
    %v740 = vxor.u32 %v739, 2147483648
    %v741 = vmul.f32 %v740, 1.442695
    %v742 = vpow.pop %v741
    %v743 = vadd.f32 %v742, 1.0
    %v744 = vrcp.pop %v743
    %v745 = vmul.f32 %v743, %v744
    %v746 = vsub.f32 1.0, %v745
    %v747 = vmul.f32 %v744, %v746
    %v748 = vadd.f32 %v744, %v747
    %vm749 = vweird.f32 %v743
    %vm750 = vweird.f32 %v744
    %vm751 = vmor %vm749, %vm750
    %v752 = vsel %vm751, %v744, %v748
    %v753 = vand.u32 2147483647, %v743
    %vm754 = vcmp.eq.f32.partialorder %v753, 8.507059e+37
    %v755 = vand.u32 %v743, 2147483648
    %v756 = vor.u32 1.1754944e-38, %v755
    %v757 = vsel %vm754, %v756, %v752
    %v758 = vmul.f32 1.0, %v757
    %v759 = vtanh.pop %v739
    %761 = vrot.lane.b32.xlu0 %v712, 64
    %v762 = vpop.permute.xlu0 %761
    %v764 = vmul.f32 %v758, %v762
    %766 = vrot.lane.b32.xlu0 %v759, 64
    %v767 = vpop.permute.xlu0 %766
    %v769 = vmul.f32 %v758, %v767
    %771 = vrot.lane.b32.xlu0 %v769, 32
    %v772 = vpop.permute.xlu0 %771
    %v774 = vadd.f32 %v764, %v772
    %v775 = vtanh.pop %v774
    %777 = vrot.lane.b32.xlu0 %v775, 64
    %v778 = vpop.permute.xlu0 %777
    %v780 = vmul.f32 %v758, %v778
    %v781 = vld [vmem:[%s346] sm:$0xff]
    %783 = vrot.lane.b32.xlu0 %v774, 96
    %v784 = vpop.permute.xlu0 %783
    %v785 = vsel %vm515, %v784, 0
    %787 = vmatpush.msra.mxu0 0.0
    %788 = vmatpush.msra.mxu0 0.0
    %789 = vmatpush.msra.mxu0 0.0
    %790 = vmatpush.msra.mxu0 0.0
    %791 = vmatpush.msra.mxu0 0.0
    %792 = vmatpush.msra.mxu0 0.0
    %793 = vmatpush.msra.mxu0 0.0
    %794 = vmatpush.msra.mxu0 0.0
    %795 = vmatpush.msra.mxu0 0.0
    %796 = vmatpush.msra.mxu0 0.0
    %797 = vmatpush.msra.mxu0 0.0
    %798 = vmatpush.msra.mxu0 0.0
    %799 = vmatpush.msra.mxu0 %v513
    %800 = vmatpush.msra.mxu0 %v512
    %801 = vmatpush.msra.mxu0 %v511
    %802 = vmatpush.msra.mxu0 %v510
    %803 = vmatmul.f32.gmra.mxu0 %v785
    %v804 = vpop.f32.mrf.mxu0
    %v805 = vadd.f32 0.0, %v804
    %806 = vdwg.mxu0
    %v807 = vadd.f32 %v781, %v805
    %v808 = vxor.u32 %v807, 2147483648
    %v809 = vmul.f32 %v808, 1.442695
    %v810 = vpow.pop %v809
    %v811 = vadd.f32 %v810, 1.0
    %v812 = vrcp.pop %v811
    %v813 = vmul.f32 %v811, %v812
    %v814 = vsub.f32 1.0, %v813
    %v815 = vmul.f32 %v812, %v814
    %v816 = vadd.f32 %v812, %v815
    %vm817 = vweird.f32 %v811
    %vm818 = vweird.f32 %v812
    %vm819 = vmor %vm817, %vm818
    %v820 = vsel %vm819, %v812, %v816
    %v821 = vand.u32 2147483647, %v811
    %vm822 = vcmp.eq.f32.partialorder %v821, 8.507059e+37
    %v823 = vand.u32 %v811, 2147483648
    %v824 = vor.u32 1.1754944e-38, %v823
    %v825 = vsel %vm822, %v824, %v820
    %v826 = vmul.f32 1.0, %v825
    %v827 = vtanh.pop %v807
    %829 = vrot.lane.b32.xlu0 %v780, 64
    %v830 = vpop.permute.xlu0 %829
    %v832 = vmul.f32 %v826, %v830
    %834 = vrot.lane.b32.xlu0 %v827, 64
    %v835 = vpop.permute.xlu0 %834
    %v837 = vmul.f32 %v826, %v835
    %839 = vrot.lane.b32.xlu0 %v837, 32
    %v840 = vpop.permute.xlu0 %839
    %v842 = vadd.f32 %v832, %v840
    %v843 = vtanh.pop %v842
    %845 = vrot.lane.b32.xlu0 %v843, 64
    %v846 = vpop.permute.xlu0 %845
    %v848 = vmul.f32 %v826, %v846
    %v849 = vld [vmem:[%s400] sm:$0xff]
    %851 = vrot.lane.b32.xlu0 %v842, 96
    %v852 = vpop.permute.xlu0 %851
    %v853 = vsel %vm515, %v852, 0
    %855 = vmatpush.msra.mxu0 0.0
    %856 = vmatpush.msra.mxu0 0.0
    %857 = vmatpush.msra.mxu0 0.0
    %858 = vmatpush.msra.mxu0 0.0
    %859 = vmatpush.msra.mxu0 0.0
    %860 = vmatpush.msra.mxu0 0.0
    %861 = vmatpush.msra.mxu0 0.0
    %862 = vmatpush.msra.mxu0 0.0
    %863 = vmatpush.msra.mxu0 0.0
    %864 = vmatpush.msra.mxu0 0.0
    %865 = vmatpush.msra.mxu0 0.0
    %866 = vmatpush.msra.mxu0 0.0
    %867 = vmatpush.msra.mxu0 %v513
    %868 = vmatpush.msra.mxu0 %v512
    %869 = vmatpush.msra.mxu0 %v511
    %870 = vmatpush.msra.mxu0 %v510
    %871 = vmatmul.f32.gmra.mxu0 %v853
    %v872 = vpop.f32.mrf.mxu0
    %v873 = vadd.f32 0.0, %v872
    %874 = vdwg.mxu0
    %v875 = vadd.f32 %v849, %v873
    %v876 = vxor.u32 %v875, 2147483648
    %v877 = vmul.f32 %v876, 1.442695
    %v878 = vpow.pop %v877
    %v879 = vadd.f32 %v878, 1.0
    %v880 = vrcp.pop %v879
    %v881 = vmul.f32 %v879, %v880
    %v882 = vsub.f32 1.0, %v881
    %v883 = vmul.f32 %v880, %v882
    %v884 = vadd.f32 %v880, %v883
    %vm885 = vweird.f32 %v879
    %vm886 = vweird.f32 %v880
    %vm887 = vmor %vm885, %vm886
    %v888 = vsel %vm887, %v880, %v884
    %v889 = vand.u32 2147483647, %v879
    %vm890 = vcmp.eq.f32.partialorder %v889, 8.507059e+37
    %v891 = vand.u32 %v879, 2147483648
    %v892 = vor.u32 1.1754944e-38, %v891
    %v893 = vsel %vm890, %v892, %v888
    %v894 = vmul.f32 1.0, %v893
    %v895 = vtanh.pop %v875
    %897 = vrot.lane.b32.xlu0 %v848, 64
    %v898 = vpop.permute.xlu0 %897
    %v900 = vmul.f32 %v894, %v898
    %902 = vrot.lane.b32.xlu0 %v895, 64
    %v903 = vpop.permute.xlu0 %902
    %v905 = vmul.f32 %v894, %v903
    %907 = vrot.lane.b32.xlu0 %v905, 32
    %v908 = vpop.permute.xlu0 %907
    %v910 = vadd.f32 %v900, %v908
    %v911 = vtanh.pop %v910
    %913 = vrot.lane.b32.xlu0 %v911, 64
    %v914 = vpop.permute.xlu0 %913
    %v916 = vmul.f32 %v894, %v914
    %v917 = vld [vmem:[%s454] sm:$0xff]
    %919 = vrot.lane.b32.xlu0 %v910, 96
    %v920 = vpop.permute.xlu0 %919
    %v921 = vsel %vm515, %v920, 0
    %923 = vmatpush.msra.mxu0 0.0
    %924 = vmatpush.msra.mxu0 0.0
    %925 = vmatpush.msra.mxu0 0.0
    %926 = vmatpush.msra.mxu0 0.0
    %927 = vmatpush.msra.mxu0 0.0
    %928 = vmatpush.msra.mxu0 0.0
    %929 = vmatpush.msra.mxu0 0.0
    %930 = vmatpush.msra.mxu0 0.0
    %931 = vmatpush.msra.mxu0 0.0
    %932 = vmatpush.msra.mxu0 0.0
    %933 = vmatpush.msra.mxu0 0.0
    %934 = vmatpush.msra.mxu0 0.0
    %935 = vmatpush.msra.mxu0 %v513
    %936 = vmatpush.msra.mxu0 %v512
    %937 = vmatpush.msra.mxu0 %v511
    %938 = vmatpush.msra.mxu0 %v510
    %939 = vmatmul.f32.gmra.mxu0 %v921
    %v940 = vpop.f32.mrf.mxu0
    %v941 = vadd.f32 0.0, %v940
    %942 = vdwg.mxu0
    %v943 = vadd.f32 %v917, %v941
    %v944 = vxor.u32 %v943, 2147483648
    %v945 = vmul.f32 %v944, 1.442695
    %v946 = vpow.pop %v945
    %v947 = vadd.f32 %v946, 1.0
    %v948 = vrcp.pop %v947
    %v949 = vmul.f32 %v947, %v948
    %v950 = vsub.f32 1.0, %v949
    %v951 = vmul.f32 %v948, %v950
    %v952 = vadd.f32 %v948, %v951
    %vm953 = vweird.f32 %v947
    %vm954 = vweird.f32 %v948
    %vm955 = vmor %vm953, %vm954
    %v956 = vsel %vm955, %v948, %v952
    %v957 = vand.u32 2147483647, %v947
    %vm958 = vcmp.eq.f32.partialorder %v957, 8.507059e+37
    %v959 = vand.u32 %v947, 2147483648
    %v960 = vor.u32 1.1754944e-38, %v959
    %v961 = vsel %vm958, %v960, %v956
    %v962 = vmul.f32 1.0, %v961
    %v963 = vtanh.pop %v943
    %965 = vrot.lane.b32.xlu0 %v916, 64
    %v966 = vpop.permute.xlu0 %965
    %v968 = vmul.f32 %v962, %v966
    %970 = vrot.lane.b32.xlu0 %v963, 64
    %v971 = vpop.permute.xlu0 %970
    %v973 = vmul.f32 %v962, %v971
    %975 = vrot.lane.b32.xlu0 %v973, 32
    %v976 = vpop.permute.xlu0 %975
    %v978 = vadd.f32 %v968, %v976
    %v979 = vtanh.pop %v978
    %981 = vrot.lane.b32.xlu0 %v979, 64
    %v982 = vpop.permute.xlu0 %981
    %v984 = vmul.f32 %v962, %v982
    %v985 = vld [vmem:[%s508] sm:$0xff]
    %987 = vrot.lane.b32.xlu0 %v978, 96
    %v988 = vpop.permute.xlu0 %987
    %v989 = vsel %vm515, %v988, 0
    %991 = vmatpush.msra.mxu0 0.0
    %992 = vmatpush.msra.mxu0 0.0
    %993 = vmatpush.msra.mxu0 0.0
    %994 = vmatpush.msra.mxu0 0.0
    %995 = vmatpush.msra.mxu0 0.0
    %996 = vmatpush.msra.mxu0 0.0
    %997 = vmatpush.msra.mxu0 0.0
    %998 = vmatpush.msra.mxu0 0.0
    %999 = vmatpush.msra.mxu0 0.0
    %1000 = vmatpush.msra.mxu0 0.0
    %1001 = vmatpush.msra.mxu0 0.0
    %1002 = vmatpush.msra.mxu0 0.0
    %1003 = vmatpush.msra.mxu0 %v513
    %1004 = vmatpush.msra.mxu0 %v512
    %1005 = vmatpush.msra.mxu0 %v511
    %1006 = vmatpush.msra.mxu0 %v510
    %1007 = vmatmul.f32.gmra.mxu0 %v989
    %v1008 = vpop.f32.mrf.mxu0
    %v1009 = vadd.f32 0.0, %v1008
    %1010 = vdwg.mxu0
    %v1011 = vadd.f32 %v985, %v1009
    %v1012 = vxor.u32 %v1011, 2147483648
    %v1013 = vmul.f32 %v1012, 1.442695
    %v1014 = vpow.pop %v1013
    %v1015 = vadd.f32 %v1014, 1.0
    %v1016 = vrcp.pop %v1015
    %v1017 = vmul.f32 %v1015, %v1016
    %v1018 = vsub.f32 1.0, %v1017
    %v1019 = vmul.f32 %v1016, %v1018
    %v1020 = vadd.f32 %v1016, %v1019
    %vm1021 = vweird.f32 %v1015
    %vm1022 = vweird.f32 %v1016
    %vm1023 = vmor %vm1021, %vm1022
    %v1024 = vsel %vm1023, %v1016, %v1020
    %v1025 = vand.u32 2147483647, %v1015
    %vm1026 = vcmp.eq.f32.partialorder %v1025, 8.507059e+37
    %v1027 = vand.u32 %v1015, 2147483648
    %v1028 = vor.u32 1.1754944e-38, %v1027
    %v1029 = vsel %vm1026, %v1028, %v1024
    %v1030 = vmul.f32 1.0, %v1029
    %v1031 = vtanh.pop %v1011
    %1033 = vrot.lane.b32.xlu0 %v984, 64
    %v1034 = vpop.permute.xlu0 %1033
    %v1036 = vmul.f32 %v1030, %v1034
    %1038 = vrot.lane.b32.xlu0 %v1031, 64
    %v1039 = vpop.permute.xlu0 %1038
    %v1041 = vmul.f32 %v1030, %v1039
    %1043 = vrot.lane.b32.xlu0 %v1041, 32
    %v1044 = vpop.permute.xlu0 %1043
    %v1046 = vadd.f32 %v1036, %v1044
    %1048 = vrot.lane.b32.xlu0 %v1046, 72
    %v1049 = vpop.permute.xlu0 %1048
    %vm1051 = vcmask 64512
    %1052 = vst.msk [vmem:[#allocation9] sm:$0xff] %vm1051, %v1049
    // Predicated region
    $region30: #{lstm_forward.1} parent=1 // pred_check
      _
    $region31: #{lstm_forward.1} parent=1 // pred_check_branch
      %1054 = sbr.rel (0) target = $region33
    $region32: #{lstm_forward.1} parent=1 // pred_region
      %1056 = vsyncadd [#allocation5], 0
      %s1058 = sshll.u32 [#allocation9], 4
      %s1059 = int_to_ptr.vmem [resolvable:$true] %s1058
      %s1060 = sshll.u32 %s4, 4
      %s1061 = int_to_ptr.hbm [resolvable:$true] %s1060
      %1063 = dma.vmem_to_hbm [thread:$0]  %s1059, 128, %s1061, [#allocation5]
    $region33: #{lstm_forward.1} parent=1 // pred_fallthru
      _
    // Predicated region
    $region34: #{lstm_forward.1} parent=1 // pred_check
      _
    $region35: #{lstm_forward.1} parent=1 // pred_check_branch
      %1065 = sbr.rel (0) target = $region37
    $region36: #{lstm_forward.1} parent=1 // pred_region
      %1067 = dma.done [#allocation5], 128
    $region37: #{lstm_forward.1} parent=1 // pred_fallthru
      _
    %1068 = vsyncpa [#allocation4], 1
    %1069 = vsyncpa [#allocation7], 1
    %1070 = vsyncpa [#allocation5], 1

</llo_original>
